<compile_context>
chip_gen: v5e
topology: v5e:2x2
jax: 0.10.0
libtpu: 0.0.40
codegen_flags: <defaults>
</compile_context>

<pallas_src>
import functools

import jax
import jax.numpy as jnp
from jax.experimental import pallas as pl
from jax.experimental.pallas import tpu as pltpu


def _round_up(a, m):
    return (a + m - 1) // m * m


def _dwconv_kernel(x_ref, w_ref, b_ref, o_ref, xp_ref, *, th):
    # x_ref : (H, W, TC)       input block (batch dim squeezed), original dtype
    # w_ref : (3, 3, TC)       depthwise weights for this channel tile
    # b_ref : (1, TC)          bias for this channel tile
    # o_ref : (H, W, TC)       output block
    # xp_ref: (H + 2, Wp, TC)  zero-bordered VMEM scratch, Wp >= W + 2
    H, W, TC = o_ref.shape
    n_strips = H // th

    # Zero the halo border (rows 0 / H+1, cols 0 / W+1). Cheap VMEM stores.
    zrow = jnp.zeros((1, xp_ref.shape[1], TC), xp_ref.dtype)
    zcol = jnp.zeros((H + 2, 1, TC), xp_ref.dtype)
    xp_ref[0:1, :, :] = zrow
    xp_ref[H + 1:H + 2, :, :] = zrow
    xp_ref[:, 0:1, :] = zcol
    xp_ref[:, W + 1:W + 2, :] = zcol

    # Copy the unpadded block into the scratch interior, strip by strip
    # (bounds the transient value size). This replaces the host-side jnp.pad.
    @pl.loop(0, n_strips)
    def _(s):
        r0 = pl.multiple_of(s * th, th)
        xp_ref[pl.ds(r0 + 1, th), 1:W + 1, :] = x_ref[pl.ds(r0, th), :, :]

    w = w_ref[...].astype(jnp.float32)       # (3, 3, TC)
    bias = b_ref[0].astype(jnp.float32)      # (TC,)

    # 9-tap depthwise conv, strip-mined over TH output rows.
    @pl.loop(0, n_strips)
    def _(s):
        r0 = pl.multiple_of(s * th, th)
        acc = jnp.broadcast_to(bias, (th, W, TC))      # bias-initialized accumulator
        for dh in range(3):
            for dw in range(3):
                tap = xp_ref[pl.ds(r0 + dh, th), dw:dw + W, :].astype(jnp.float32)
                acc = acc + tap * w[dh, dw]
        o_ref[pl.ds(r0, th), :, :] = acc.astype(o_ref.dtype)


def dwconv(x, weight, bias, H, W):
    """Depthwise 3x3 conv matching DWConv.forward.

    x      : (B, N, C) tokens, N == H * W (token order n = h * W + w)
    weight : (C, 1, 3, 3) PyTorch nn.Conv2d(dim, dim, 3, groups=dim) weight
    bias   : (C,)
    returns: (B, N, C)
    """
    B, N, C = x.shape
    assert N == H * W

    x_sp = x.reshape(B, H, W, C)                     # same token order as transpose(1,2).view
    w33c = jnp.transpose(weight[:, 0], (1, 2, 0))    # (3, 3, C)
    bias2d = bias.reshape(1, C)

    # Channel tile: lane-dense 128 when possible, otherwise the full channel dim.
    TC = 128 if C % 128 == 0 else C
    n_ct = C // TC

    # Row-strip size for the in-kernel accumulation loop.
    TH = next((t for t in (8, 16, 32) if H % t == 0), H)

    Wp = _round_up(W + 2, 8)                         # sublane-aligned padded width
    itemsize = x.dtype.itemsize

    blk_bytes = H * W * TC * itemsize
    scratch_bytes = (H + 2) * Wp * TC * itemsize
    # 2x double-buffered input + output blocks + scratch + slack.
    vmem_bytes = 4 * blk_bytes + scratch_bytes + (2 << 20)
    vmem_limit = int(min(max(vmem_bytes, 16 << 20), 64 << 20))

    cost = pl.CostEstimate(
        flops=2 * 9 * B * H * W * C,
        transcendentals=0,
        bytes_accessed=2 * B * H * W * C * itemsize + 10 * C * itemsize,
    )

    kernel = functools.partial(_dwconv_kernel, th=TH)

    out = pl.pallas_call(
        kernel,
        out_shape=jax.ShapeDtypeStruct((B, H, W, C), x.dtype),
        grid_spec=pltpu.PrefetchScalarGridSpec(
            num_scalar_prefetch=0,
            grid=(B, n_ct),
            in_specs=[
                pl.BlockSpec((None, H, W, TC), lambda b, c: (b, 0, 0, c)),
                pl.BlockSpec((3, 3, TC), lambda b, c: (0, 0, c)),
                pl.BlockSpec((1, TC), lambda b, c: (0, c)),
            ],
            out_specs=pl.BlockSpec((None, H, W, TC), lambda b, c: (b, 0, 0, c)),
            scratch_shapes=[pltpu.VMEM((H + 2, Wp, TC), x.dtype)],
        ),
        compiler_params=pltpu.CompilerParams(
            dimension_semantics=("parallel", "parallel"),
            vmem_limit_bytes=vmem_limit,
        ),
        cost_estimate=cost,
    )(x_sp, w33c, bias2d)

    # TODO(synk): for very large H*W (where an (H, W, 128) block would exceed the
    # per-generation VMEM budget) additionally tile the grid over H row-strips
    # with a manual halo DMA from a memory_space=pl.ANY input.
    return out.reshape(B, N, C)


def dwconv_ref(x, weight, bias, H, W):
    """Pure-JAX reference (same math, no Pallas). weight is (C, 1, 3, 3)."""
    B, N, C = x.shape
    w = jnp.transpose(weight[:, 0], (1, 2, 0)).astype(jnp.float32)   # (3, 3, C)
    xs = x.reshape(B, H, W, C).astype(jnp.float32)
    xp = jnp.pad(xs, ((0, 0), (1, 1), (1, 1), (0, 0)))
    acc = jnp.zeros((B, H, W, C), jnp.float32) + bias.astype(jnp.float32)
    for dh in range(3):
        for dw in range(3):
            acc = acc + xp[:, dh:dh + H, dw:dw + W, :] * w[dh, dw]
    return acc.reshape(B, N, C).astype(x.dtype)


if __name__ == "__main__":
    # Small shapes consistent with the module's forward: x is (B, N, C), N = H*W.
    B, C, H, W = 2, 8, 16, 16
    N = H * W

    key = jax.random.PRNGKey(0)
    kx, kw, kb = jax.random.split(key, 3)

    x = jax.random.normal(kx, (B, N, C), dtype=jnp.float32)
    # nn.Conv2d(dim, dim, 3, groups=dim) weight layout: (C, 1, 3, 3)
    weight = jax.random.normal(kw, (C, 1, 3, 3), dtype=jnp.float32) * 0.1
    bias = jax.random.normal(kb, (C,), dtype=jnp.float32) * 0.1

    out = dwconv(x, weight, bias, H, W)
    out = jax.block_until_ready(out)

    ref = dwconv_ref(x, weight, bias, H, W)
    assert out.shape == (B, N, C)
    assert jnp.allclose(out, ref, atol=1e-5, rtol=1e-5), "Pallas kernel mismatch vs reference"

    print("KERNEL_OK")
</pallas_src>

<mosaic_0001>
module attributes {stable_mosaic.version = 11 : i64} {
  func.func @_dwconv_kernel(%arg0: i32, %arg1: i32, %arg2: memref<1x16x16x8xf32, #tpu.memory_space<vmem>>, %arg3: memref<3x3x8xf32, #tpu.memory_space<vmem>>, %arg4: memref<1x8xf32, #tpu.memory_space<vmem>>, %arg5: memref<1x16x16x8xf32, #tpu.memory_space<vmem>>, %arg6: memref<18x24x8xf32, #tpu.memory_space<vmem>>) attributes {dimension_semantics = [#tpu.dimension_semantics<parallel>, #tpu.dimension_semantics<parallel>], iteration_bounds = array<i64: 2, 1>, scalar_prefetch = 0 : i64, scratch_operands = 1 : i64, tpu.core_type = #tpu.core_type<tc>, window_params = [{transform_indices = @transform_0, window_bounds = array<i64: 1, 16, 16, 8>}, {transform_indices = @transform_1, window_bounds = array<i64: 3, 3, 8>}, {transform_indices = @transform_2, window_bounds = array<i64: 1, 8>}, {transform_indices = @transform_3, window_bounds = array<i64: 1, 16, 16, 8>}]} {
    %cst = arith.constant 0.000000e+00 : f32
    %0 = vector.broadcast %cst : f32 to vector<1x24x8xf32>
    %cst_0 = arith.constant 0.000000e+00 : f32
    %1 = vector.broadcast %cst_0 : f32 to vector<18x1x8xf32>
    %c0 = arith.constant 0 : index
    %c0_1 = arith.constant 0 : index
    %c0_2 = arith.constant 0 : index
    %2 = vector.load %arg6[%c0, %c0_1, %c0_2] : memref<18x24x8xf32, #tpu.memory_space<vmem>>, vector<1x24x8xf32>
    tpu.vector_store %arg6[%c0, %c0_1, %c0_2], %0 {strides = array<i32>} : memref<18x24x8xf32, #tpu.memory_space<vmem>>, vector<1x24x8xf32>,
    %c17 = arith.constant 17 : index
    %c0_3 = arith.constant 0 : index
    %c0_4 = arith.constant 0 : index
    %3 = vector.load %arg6[%c17, %c0_3, %c0_4] : memref<18x24x8xf32, #tpu.memory_space<vmem>>, vector<1x24x8xf32>
    tpu.vector_store %arg6[%c17, %c0_3, %c0_4], %0 {strides = array<i32>} : memref<18x24x8xf32, #tpu.memory_space<vmem>>, vector<1x24x8xf32>,
    %c0_5 = arith.constant 0 : index
    %c0_6 = arith.constant 0 : index
    %c0_7 = arith.constant 0 : index
    %4 = vector.load %arg6[%c0_5, %c0_6, %c0_7] : memref<18x24x8xf32, #tpu.memory_space<vmem>>, vector<18x1x8xf32>
    tpu.vector_store %arg6[%c0_5, %c0_6, %c0_7], %1 {strides = array<i32>} : memref<18x24x8xf32, #tpu.memory_space<vmem>>, vector<18x1x8xf32>,
    %c0_8 = arith.constant 0 : index
    %c17_9 = arith.constant 17 : index
    %c0_10 = arith.constant 0 : index
    %5 = vector.load %arg6[%c0_8, %c17_9, %c0_10] : memref<18x24x8xf32, #tpu.memory_space<vmem>>, vector<18x1x8xf32>
    tpu.vector_store %arg6[%c0_8, %c17_9, %c0_10], %1 {strides = array<i32>} : memref<18x24x8xf32, #tpu.memory_space<vmem>>, vector<18x1x8xf32>,
    %c0_i32 = arith.constant 0 : i32
    %c2_i32 = arith.constant 2 : i32
    %6 = arith.addi %c0_i32, %c2_i32 : i32
    %c1_i32 = arith.constant 1 : i32
    scf.for %arg7 = %c0_i32 to %6 step %c1_i32  : i32 {
      %c1_i32_21 = arith.constant 1 : i32
      %11 = arith.muli %arg7, %c1_i32_21 : i32
      %c0_i32_22 = arith.constant 0 : i32
      %12 = arith.addi %c0_i32_22, %11 : i32
      %c8_i32 = arith.constant 8 : i32
      %13 = arith.muli %12, %c8_i32 : i32
      %14 = tpu.assume_multiple %13, 8 : i32
      %c0_23 = arith.constant 0 : index
      %15 = arith.index_cast %14 : i32 to index
      %c0_24 = arith.constant 0 : index
      %c0_25 = arith.constant 0 : index
      %16 = vector.load %arg2[%c0_23, %15, %c0_24, %c0_25] : memref<1x16x16x8xf32, #tpu.memory_space<vmem>>, vector<1x8x16x8xf32>
      %17 = vector.shape_cast %16 : vector<1x8x16x8xf32> to vector<8x16x8xf32>
      %c1_i32_26 = arith.constant 1 : i32
      %18 = arith.addi %14, %c1_i32_26 : i32
      %19 = arith.index_cast %18 : i32 to index
      %c1 = arith.constant 1 : index
      %c0_27 = arith.constant 0 : index
      %20 = vector.load %arg6[%19, %c1, %c0_27] : memref<18x24x8xf32, #tpu.memory_space<vmem>>, vector<8x16x8xf32>
      tpu.vector_store %arg6[%19, %c1, %c0_27], %17 {strides = array<i32>} : memref<18x24x8xf32, #tpu.memory_space<vmem>>, vector<8x16x8xf32>,
    }
    %c2_i32_11 = arith.constant 2 : i32
    %c0_12 = arith.constant 0 : index
    %c0_13 = arith.constant 0 : index
    %c0_14 = arith.constant 0 : index
    %7 = vector.load %arg3[%c0_12, %c0_13, %c0_14] : memref<3x3x8xf32, #tpu.memory_space<vmem>>, vector<3x3x8xf32>
    %c0_15 = arith.constant 0 : index
    %c0_16 = arith.constant 0 : index
    %8 = vector.load %arg4[%c0_15, %c0_16] : memref<1x8xf32, #tpu.memory_space<vmem>>, vector<1x8xf32>
    %9 = vector.shape_cast %8 : vector<1x8xf32> to vector<8xf32>
    %c0_i32_17 = arith.constant 0 : i32
    %c2_i32_18 = arith.constant 2 : i32
    %10 = arith.addi %c0_i32_17, %c2_i32_18 : i32
    %c1_i32_19 = arith.constant 1 : i32
    scf.for %arg7 = %c0_i32_17 to %10 step %c1_i32_19  : i32 {
      %c1_i32_21 = arith.constant 1 : i32
      %11 = arith.muli %arg7, %c1_i32_21 : i32
      %c0_i32_22 = arith.constant 0 : i32
      %12 = arith.addi %c0_i32_22, %11 : i32
      %c8_i32 = arith.constant 8 : i32
      %13 = arith.muli %12, %c8_i32 : i32
      %14 = tpu.assume_multiple %13, 8 : i32
      %15 = vector.shape_cast %9 : vector<8xf32> to vector<1x1x8xf32>
      %16 = vector.broadcast %15 : vector<1x1x8xf32> to vector<8x16x8xf32>
      %c0_i32_23 = arith.constant 0 : i32
      %17 = arith.addi %14, %c0_i32_23 : i32
      %18 = arith.index_cast %17 : i32 to index
      %c0_24 = arith.constant 0 : index
      %c0_25 = arith.constant 0 : index
      %19 = vector.load %arg6[%18, %c0_24, %c0_25] : memref<18x24x8xf32, #tpu.memory_space<vmem>>, vector<8x16x8xf32>
      %20 = vector.extract_strided_slice %7 {offsets = [0, 0, 0], sizes = [1, 1, 8], strides = [1, 1, 1]} : vector<3x3x8xf32> to vector<1x1x8xf32>
      %21 = vector.shape_cast %20 : vector<1x1x8xf32> to vector<8xf32>
      %22 = vector.shape_cast %21 : vector<8xf32> to vector<1x1x8xf32>
      %23 = vector.broadcast %22 : vector<1x1x8xf32> to vector<8x16x8xf32>
      %24 = arith.mulf %19, %23 : vector<8x16x8xf32>
      %25 = arith.addf %16, %24 : vector<8x16x8xf32>
      %c0_i32_26 = arith.constant 0 : i32
      %26 = arith.addi %14, %c0_i32_26 : i32
      %27 = arith.index_cast %26 : i32 to index
      %c1 = arith.constant 1 : index
      %c0_27 = arith.constant 0 : index
      %28 = vector.load %arg6[%27, %c1, %c0_27] : memref<18x24x8xf32, #tpu.memory_space<vmem>>, vector<8x16x8xf32>
      %29 = vector.extract_strided_slice %7 {offsets = [0, 1, 0], sizes = [1, 1, 8], strides = [1, 1, 1]} : vector<3x3x8xf32> to vector<1x1x8xf32>
      %30 = vector.shape_cast %29 : vector<1x1x8xf32> to vector<8xf32>
      %31 = vector.shape_cast %30 : vector<8xf32> to vector<1x1x8xf32>
      %32 = vector.broadcast %31 : vector<1x1x8xf32> to vector<8x16x8xf32>
      %33 = arith.mulf %28, %32 : vector<8x16x8xf32>
      %34 = arith.addf %25, %33 : vector<8x16x8xf32>
      %c0_i32_28 = arith.constant 0 : i32
      %35 = arith.addi %14, %c0_i32_28 : i32
      %36 = arith.index_cast %35 : i32 to index
      %c2 = arith.constant 2 : index
      %c0_29 = arith.constant 0 : index
      %37 = vector.load %arg6[%36, %c2, %c0_29] : memref<18x24x8xf32, #tpu.memory_space<vmem>>, vector<8x16x8xf32>
      %38 = vector.extract_strided_slice %7 {offsets = [0, 2, 0], sizes = [1, 1, 8], strides = [1, 1, 1]} : vector<3x3x8xf32> to vector<1x1x8xf32>
      %39 = vector.shape_cast %38 : vector<1x1x8xf32> to vector<8xf32>
      %40 = vector.shape_cast %39 : vector<8xf32> to vector<1x1x8xf32>
      %41 = vector.broadcast %40 : vector<1x1x8xf32> to vector<8x16x8xf32>
      %42 = arith.mulf %37, %41 : vector<8x16x8xf32>
      %43 = arith.addf %34, %42 : vector<8x16x8xf32>
      %c1_i32_30 = arith.constant 1 : i32
      %44 = arith.addi %14, %c1_i32_30 : i32
      %45 = arith.index_cast %44 : i32 to index
      %c0_31 = arith.constant 0 : index
      %c0_32 = arith.constant 0 : index
      %46 = vector.load %arg6[%45, %c0_31, %c0_32] : memref<18x24x8xf32, #tpu.memory_space<vmem>>, vector<8x16x8xf32>
      %47 = vector.extract_strided_slice %7 {offsets = [1, 0, 0], sizes = [1, 1, 8], strides = [1, 1, 1]} : vector<3x3x8xf32> to vector<1x1x8xf32>
      %48 = vector.shape_cast %47 : vector<1x1x8xf32> to vector<8xf32>
      %49 = vector.shape_cast %48 : vector<8xf32> to vector<1x1x8xf32>
      %50 = vector.broadcast %49 : vector<1x1x8xf32> to vector<8x16x8xf32>
      %51 = arith.mulf %46, %50 : vector<8x16x8xf32>
      %52 = arith.addf %43, %51 : vector<8x16x8xf32>
      %c1_i32_33 = arith.constant 1 : i32
      %53 = arith.addi %14, %c1_i32_33 : i32
      %54 = arith.index_cast %53 : i32 to index
      %c1_34 = arith.constant 1 : index
      %c0_35 = arith.constant 0 : index
      %55 = vector.load %arg6[%54, %c1_34, %c0_35] : memref<18x24x8xf32, #tpu.memory_space<vmem>>, vector<8x16x8xf32>
      %56 = vector.extract_strided_slice %7 {offsets = [1, 1, 0], sizes = [1, 1, 8], strides = [1, 1, 1]} : vector<3x3x8xf32> to vector<1x1x8xf32>
      %57 = vector.shape_cast %56 : vector<1x1x8xf32> to vector<8xf32>
      %58 = vector.shape_cast %57 : vector<8xf32> to vector<1x1x8xf32>
      %59 = vector.broadcast %58 : vector<1x1x8xf32> to vector<8x16x8xf32>
      %60 = arith.mulf %55, %59 : vector<8x16x8xf32>
      %61 = arith.addf %52, %60 : vector<8x16x8xf32>
      %c1_i32_36 = arith.constant 1 : i32
      %62 = arith.addi %14, %c1_i32_36 : i32
      %63 = arith.index_cast %62 : i32 to index
      %c2_37 = arith.constant 2 : index
      %c0_38 = arith.constant 0 : index
      %64 = vector.load %arg6[%63, %c2_37, %c0_38] : memref<18x24x8xf32, #tpu.memory_space<vmem>>, vector<8x16x8xf32>
      %65 = vector.extract_strided_slice %7 {offsets = [1, 2, 0], sizes = [1, 1, 8], strides = [1, 1, 1]} : vector<3x3x8xf32> to vector<1x1x8xf32>
      %66 = vector.shape_cast %65 : vector<1x1x8xf32> to vector<8xf32>
      %67 = vector.shape_cast %66 : vector<8xf32> to vector<1x1x8xf32>
      %68 = vector.broadcast %67 : vector<1x1x8xf32> to vector<8x16x8xf32>
      %69 = arith.mulf %64, %68 : vector<8x16x8xf32>
      %70 = arith.addf %61, %69 : vector<8x16x8xf32>
      %c2_i32_39 = arith.constant 2 : i32
      %71 = arith.addi %14, %c2_i32_39 : i32
      %72 = arith.index_cast %71 : i32 to index
      %c0_40 = arith.constant 0 : index
      %c0_41 = arith.constant 0 : index
      %73 = vector.load %arg6[%72, %c0_40, %c0_41] : memref<18x24x8xf32, #tpu.memory_space<vmem>>, vector<8x16x8xf32>
      %74 = vector.extract_strided_slice %7 {offsets = [2, 0, 0], sizes = [1, 1, 8], strides = [1, 1, 1]} : vector<3x3x8xf32> to vector<1x1x8xf32>
      %75 = vector.shape_cast %74 : vector<1x1x8xf32> to vector<8xf32>
      %76 = vector.shape_cast %75 : vector<8xf32> to vector<1x1x8xf32>
      %77 = vector.broadcast %76 : vector<1x1x8xf32> to vector<8x16x8xf32>
      %78 = arith.mulf %73, %77 : vector<8x16x8xf32>
      %79 = arith.addf %70, %78 : vector<8x16x8xf32>
      %c2_i32_42 = arith.constant 2 : i32
      %80 = arith.addi %14, %c2_i32_42 : i32
      %81 = arith.index_cast %80 : i32 to index
      %c1_43 = arith.constant 1 : index
      %c0_44 = arith.constant 0 : index
      %82 = vector.load %arg6[%81, %c1_43, %c0_44] : memref<18x24x8xf32, #tpu.memory_space<vmem>>, vector<8x16x8xf32>
      %83 = vector.extract_strided_slice %7 {offsets = [2, 1, 0], sizes = [1, 1, 8], strides = [1, 1, 1]} : vector<3x3x8xf32> to vector<1x1x8xf32>
      %84 = vector.shape_cast %83 : vector<1x1x8xf32> to vector<8xf32>
      %85 = vector.shape_cast %84 : vector<8xf32> to vector<1x1x8xf32>
      %86 = vector.broadcast %85 : vector<1x1x8xf32> to vector<8x16x8xf32>
      %87 = arith.mulf %82, %86 : vector<8x16x8xf32>
      %88 = arith.addf %79, %87 : vector<8x16x8xf32>
      %c2_i32_45 = arith.constant 2 : i32
      %89 = arith.addi %14, %c2_i32_45 : i32
      %90 = arith.index_cast %89 : i32 to index
      %c2_46 = arith.constant 2 : index
      %c0_47 = arith.constant 0 : index
      %91 = vector.load %arg6[%90, %c2_46, %c0_47] : memref<18x24x8xf32, #tpu.memory_space<vmem>>, vector<8x16x8xf32>
      %92 = vector.extract_strided_slice %7 {offsets = [2, 2, 0], sizes = [1, 1, 8], strides = [1, 1, 1]} : vector<3x3x8xf32> to vector<1x1x8xf32>
      %93 = vector.shape_cast %92 : vector<1x1x8xf32> to vector<8xf32>
      %94 = vector.shape_cast %93 : vector<8xf32> to vector<1x1x8xf32>
      %95 = vector.broadcast %94 : vector<1x1x8xf32> to vector<8x16x8xf32>
      %96 = arith.mulf %91, %95 : vector<8x16x8xf32>
      %97 = arith.addf %88, %96 : vector<8x16x8xf32>
      %c0_48 = arith.constant 0 : index
      %98 = arith.index_cast %14 : i32 to index
      %c0_49 = arith.constant 0 : index
      %c0_50 = arith.constant 0 : index
      %99 = vector.load %arg5[%c0_48, %98, %c0_49, %c0_50] : memref<1x16x16x8xf32, #tpu.memory_space<vmem>>, vector<1x8x16x8xf32>
      %100 = vector.shape_cast %99 : vector<1x8x16x8xf32> to vector<8x16x8xf32>
      %101 = vector.shape_cast %97 : vector<8x16x8xf32> to vector<1x8x16x8xf32>
      tpu.vector_store %arg5[%c0_48, %98, %c0_49, %c0_50], %101 {strides = array<i32>} : memref<1x16x16x8xf32, #tpu.memory_space<vmem>>, vector<1x8x16x8xf32>,
    }
    %c2_i32_20 = arith.constant 2 : i32
    return
  }
  func.func @transform_0(%arg0: i32, %arg1: i32) -> (i32, i32, i32, i32) {
    %c0_i32 = arith.constant 0 : i32
    %c0_i32_0 = arith.constant 0 : i32
    %c0_i32_1 = arith.constant 0 : i32
    return %arg0, %c0_i32, %c0_i32_0, %arg1 : i32, i32, i32, i32
  }
  func.func @transform_1(%arg0: i32, %arg1: i32) -> (i32, i32, i32) {
    %c0_i32 = arith.constant 0 : i32
    %c0_i32_0 = arith.constant 0 : i32
    %c0_i32_1 = arith.constant 0 : i32
    return %c0_i32, %c0_i32_0, %arg1 : i32, i32, i32
  }
  func.func @transform_2(%arg0: i32, %arg1: i32) -> (i32, i32) {
    %c0_i32 = arith.constant 0 : i32
    %c0_i32_0 = arith.constant 0 : i32
    return %c0_i32, %arg1 : i32, i32
  }
  func.func @transform_3(%arg0: i32, %arg1: i32) -> (i32, i32, i32, i32) {
    %c0_i32 = arith.constant 0 : i32
    %c0_i32_0 = arith.constant 0 : i32
    %c0_i32_1 = arith.constant 0 : i32
    return %arg0, %c0_i32, %c0_i32_0, %arg1 : i32, i32, i32, i32
  }
}

</mosaic_0001>

<llo_original>
// kernel: tpu_custom_call.1
$region0: #{tpu_custom_call.1}
  #allocation0 [shape = 'u32[]', space=smem, size = 0x4, offset = 0x4, fixed_abs, tag = 'smem constant byte address 0x4 - core index']
  #allocation1 [shape = 'u32[72,128]{1,0:T(1,128)}', space=vmem, size = 0x9000, scoped, tag = 'internal scratch']
  #allocation2 [shape = 'f32[18,24,8]{2,1,0:T(8,128)}', space=vmem, size = 0x36000, scoped, tag = 'scratch operand']
  %s0 = inlined_call_operand.vmem [shape: f32[2,16,16,8], index: 0, kind: input, shape index: {}]
  %s1 = inlined_call_operand.vmem [shape: f32[3,3,8], index: 1, kind: input, shape index: {}]
  %s2 = inlined_call_operand.vmem [shape: f32[1,8], index: 2, kind: input, shape index: {}]
  %s3 = inlined_call_operand.vmem [shape: f32[2,16,16,8], index: 3, kind: output, shape index: {}]
  %s4 = sld [smem:[#allocation0]]
  $region59: #{tpu_custom_call.1} parent=0
    _
  %s6 = ssub.s32 1, %s4
  %s7 = scalar_select 0, %s6, %s4
  loop: start=0, step=1, limit=4
  $region2: #{tpu_custom_call.1} parent=0 // loop_pre_header
    _
  $region3: #{tpu_custom_call.1} parent=0 // loop_header
    %s9 = sphi 0, %s13
    %p10 = scmp.ge.s32.totalorder %s9, 4
    %s16 = sphi 0, %s28
    %s17 = sphi 0, %s24
    %s18 = sphi 0, %s16
    %s19 = sphi 0, %s17
    %s20 = sphi 0, %s18
    %s21 = sphi 0, %s19
    %s33 = sphi 0, %s35
    %s36 = sphi 0, %s33
    %s37 = sphi 0, %s36
    %s53 = sphi 0, %s37
    %s59 = sphi 0, %s61
    %s62 = sphi 0, %s59
    %s63 = sphi 0, %s62
    %s79 = sphi 0, %s63
    %s85 = sphi 0, %s87
    %s88 = sphi 0, %s85
    %s89 = sphi 0, %s88
    %s105 = sphi 0, %s89
    %s113 = sphi 0, %s115
    %s116 = sphi 0, %s113
    %s117 = sphi 0, %s116
    %s133 = sphi 0, %s117
  $region4: #{tpu_custom_call.1} parent=0 // loop_header_branch
    %12 = sbr.rel (%p10) target = $region8
  $region5: #{tpu_custom_call.1} parent=0 // loop_body
    %s14 = ssub.s32 %s9, 1
    %s15 = ssub.s32 %s9, 2
    %s22 = sadd.s32 1, %s17
    %p23 = scmp.ge.s32.totalorder %s22, 1
    %s24 = scalar_select %p23, 0, %s22
    %s25 = sadd.s32 1, %s16
    %s26 = scalar_select %p23, %s25, %s16
    %p27 = scmp.ge.s32.totalorder %s26, 2
    %s28 = scalar_select %p27, 0, %s26
    %s29 = ssub.s32 %s16, %s28
    %s30 = ssub.s32 %s17, %s24
    %s31 = sor.u32 %s29, %s30
    %p32 = scmp.eq.s32.totalorder %s31, 0
    %s34 = sadd.s32 %s33, 1
    %s35 = scalar_select %p32, %s33, %s34
    %p38 = pneg %p32
    %p39 = scmp.eq.s32.totalorder %s9, 1
    %p40 = por %p38, %p39
    %p41 = scmp.ne.s32.totalorder %s33, %s36
    %p42 = scmp.eq.s32.totalorder %s9, 0
    %p43 = por %p41, %p42
    %p44 = scmp.ne.s32.totalorder %s33, %s36
    %p45 = scmp.eq.s32.totalorder %s14, 1
    %p46 = por %p44, %p45
    %p47 = scmp.ne.s32.totalorder %s36, %s37
    %p48 = scmp.eq.s32.totalorder %s14, 0
    %p49 = por %p47, %p48
    %p50 = scmp.ne.s32.totalorder %s36, %s37
    %p51 = scmp.eq.s32.totalorder %s15, 1
    %p52 = por %p50, %p51
    %p54 = scmp.ne.s32.totalorder %s37, %s53
    %p55 = scmp.eq.s32.totalorder %s15, 0
    %p56 = por %p54, %p55
    %s57 = ssub.s32 %s17, %s24
    %p58 = scmp.eq.s32.totalorder %s57, 0
    %s60 = sadd.s32 %s59, 1
    %s61 = scalar_select %p58, %s59, %s60
    %p64 = pneg %p58
    %p65 = scmp.eq.s32.totalorder %s9, 1
    %p66 = por %p64, %p65
    %p67 = scmp.ne.s32.totalorder %s59, %s62
    %p68 = scmp.eq.s32.totalorder %s9, 0
    %p69 = por %p67, %p68
    %p70 = scmp.ne.s32.totalorder %s59, %s62
    %p71 = scmp.eq.s32.totalorder %s14, 1
    %p72 = por %p70, %p71
    %p73 = scmp.ne.s32.totalorder %s62, %s63
    %p74 = scmp.eq.s32.totalorder %s14, 0
    %p75 = por %p73, %p74
    %p76 = scmp.ne.s32.totalorder %s62, %s63
    %p77 = scmp.eq.s32.totalorder %s15, 1
    %p78 = por %p76, %p77
    %p80 = scmp.ne.s32.totalorder %s63, %s79
    %p81 = scmp.eq.s32.totalorder %s15, 0
    %p82 = por %p80, %p81
    %s83 = ssub.s32 %s17, %s24
    %p84 = scmp.eq.s32.totalorder %s83, 0
    %s86 = sadd.s32 %s85, 1
    %s87 = scalar_select %p84, %s85, %s86
    %p90 = pneg %p84
    %p91 = scmp.eq.s32.totalorder %s9, 1
    %p92 = por %p90, %p91
    %p93 = scmp.ne.s32.totalorder %s85, %s88
    %p94 = scmp.eq.s32.totalorder %s9, 0
    %p95 = por %p93, %p94
    %p96 = scmp.ne.s32.totalorder %s85, %s88
    %p97 = scmp.eq.s32.totalorder %s14, 1
    %p98 = por %p96, %p97
    %p99 = scmp.ne.s32.totalorder %s88, %s89
    %p100 = scmp.eq.s32.totalorder %s14, 0
    %p101 = por %p99, %p100
    %p102 = scmp.ne.s32.totalorder %s88, %s89
    %p103 = scmp.eq.s32.totalorder %s15, 1
    %p104 = por %p102, %p103
    %p106 = scmp.ne.s32.totalorder %s89, %s105
    %p107 = scmp.eq.s32.totalorder %s15, 0
    %p108 = por %p106, %p107
    %s109 = ssub.s32 %s16, %s28
    %s110 = ssub.s32 %s17, %s24
    %s111 = sor.u32 %s109, %s110
    %p112 = scmp.eq.s32.totalorder %s111, 0
    %s114 = sadd.s32 %s113, 1
    %s115 = scalar_select %p112, %s113, %s114
    %p118 = pneg %p112
    %p119 = scmp.eq.s32.totalorder %s9, 1
    %p120 = por %p118, %p119
    %p121 = scmp.ne.s32.totalorder %s113, %s116
    %p122 = scmp.eq.s32.totalorder %s9, 0
    %p123 = por %p121, %p122
    %p124 = scmp.ne.s32.totalorder %s113, %s116
    %p125 = scmp.eq.s32.totalorder %s14, 1
    %p126 = por %p124, %p125
    %p127 = scmp.ne.s32.totalorder %s116, %s117
    %p128 = scmp.eq.s32.totalorder %s14, 0
    %p129 = por %p127, %p128
    %p130 = scmp.ne.s32.totalorder %s116, %s117
    %p131 = scmp.eq.s32.totalorder %s15, 1
    %p132 = por %p130, %p131
    %p134 = scmp.ne.s32.totalorder %s117, %s133
    %p135 = scmp.eq.s32.totalorder %s15, 0
    %p136 = por %p134, %p135
    %p137 = scmp.le.s32.totalorder 1, %s9
    %p138 = scmp.lt.s32.totalorder %s9, 3
    %p139 = pnand %p137, %p138
    %p140 = pneg %p139
    // Predicated region
    $region9: #{tpu_custom_call.1} parent=5 // pred_check
      _
    $region10: #{tpu_custom_call.1} parent=5 // pred_check_branch
      %142 = sbr.rel (%p139) target = $region12
    $region11: #{tpu_custom_call.1} parent=5 // pred_region
      %s143 = ssub.s32 %s9, 1
      // Predicated region
      $region13: #{tpu_custom_call.1} parent=11 // pred_check
        %p144 = pneg %p75
      $region14: #{tpu_custom_call.1} parent=11 // pred_check_branch
        %146 = sbr.rel (%p144) target = $region16
      $region15: #{tpu_custom_call.1} parent=11 // pred_region
        %p147 = scmp.lt.s32.totalorder %s19, 0
        %s148 = scalar_select %p147, %s19, 0
        %s149 = smul.addr %s148, 4
        %s150 = scalar_lea.vmem %s1, %s149
      $region16: #{tpu_custom_call.1} parent=11 // pred_fallthru
        _
      // Predicated region
      $region17: #{tpu_custom_call.1} parent=11 // pred_check
        %p151 = pneg %p101
      $region18: #{tpu_custom_call.1} parent=11 // pred_check_branch
        %153 = sbr.rel (%p151) target = $region20
      $region19: #{tpu_custom_call.1} parent=11 // pred_region
        %p154 = scmp.lt.s32.totalorder %s19, 0
        %s155 = scalar_select %p154, %s19, 0
        %s156 = scalar_lea.vmem %s2, %s155
      $region20: #{tpu_custom_call.1} parent=11 // pred_fallthru
        _
    $region12: #{tpu_custom_call.1} parent=5 // pred_fallthru
      _
    %p157 = scmp.lt.s32.totalorder %s9, 2
    // Predicated region
    $region21: #{tpu_custom_call.1} parent=5 // pred_check
      %p158 = pneg %p157
    $region22: #{tpu_custom_call.1} parent=5 // pred_check_branch
      %160 = sbr.rel (%p158) target = $region24
    $region23: #{tpu_custom_call.1} parent=5 // pred_region
      // Predicated region
      $region25: #{tpu_custom_call.1} parent=23 // pred_check
        %p161 = pneg %p43
      $region26: #{tpu_custom_call.1} parent=23 // pred_check_branch
        %163 = sbr.rel (%p161) target = $region28
      $region27: #{tpu_custom_call.1} parent=23 // pred_region
        %p164 = scmp.lt.s32.totalorder %s16, 1
        %s165 = scalar_select %p164, %s16, 1
        %p166 = scmp.lt.s32.totalorder %s17, 0
        %s167 = scalar_select %p166, %s17, 0
        %s168 = smul.addr %s165, 32
        %s169 = sadd.s32 %s167, %s168
        %s170 = smul.addr %s169, 8
        %s171 = scalar_lea.vmem %s0, %s170
      $region28: #{tpu_custom_call.1} parent=23 // pred_fallthru
        _
    $region24: #{tpu_custom_call.1} parent=5 // pred_fallthru
      _
    %p172 = scmp.le.s32.totalorder 1, %s9
    %p173 = scmp.lt.s32.totalorder %s9, 3
    %p174 = pnand %p172, %p173
    %p175 = pneg %p174
    // Predicated region
    $region29: #{tpu_custom_call.1} parent=5 // pred_check
      _
    $region30: #{tpu_custom_call.1} parent=5 // pred_check_branch
      %177 = sbr.rel (%p174) target = $region32
    $region31: #{tpu_custom_call.1} parent=5 // pred_region
      %s178 = ssub.s32 %s9, 1
      %p179 = scmp.lt.s32.totalorder %s18, 1
      %s180 = scalar_select %p179, %s18, 1
      %p181 = scmp.lt.s32.totalorder %s19, 0
      %s182 = scalar_select %p181, %s19, 0
      %s183 = smul.addr %s180, 32
      %s184 = sadd.s32 %s182, %s183
      %s185 = smul.addr %s184, 8
      %s186 = scalar_lea.vmem %s0, %s185
      %p187 = pneg %p49
      %p188 = pneg %p46
      %p189 = scmp.lt.s32.totalorder %s19, 0
      %s190 = scalar_select %p189, %s19, 0
      %s191 = smul.addr %s190, 4
      %s192 = scalar_lea.vmem %s1, %s191
      %p193 = pneg %p75
      %p194 = pneg %p72
      %p195 = scmp.lt.s32.totalorder %s19, 0
      %s196 = scalar_select %p195, %s19, 0
      %s197 = scalar_lea.vmem %s2, %s196
      %p198 = pneg %p101
      %p199 = pneg %p98
      %p200 = pneg %p129
      %p201 = pneg %p126
      %p202 = scmp.lt.s32.totalorder %s18, 1
      %s203 = scalar_select %p202, %s18, 1
      %p204 = scmp.lt.s32.totalorder %s19, 0
      %s205 = scalar_select %p204, %s19, 0
      %s206 = smul.addr %s203, 32
      %s207 = sadd.s32 %s205, %s206
      %s208 = smul.addr %s207, 8
      %s209 = scalar_lea.vmem %s3, %s208
      %p210 = scmp.lt.s32.totalorder %s18, 1
      %s211 = scalar_select %p210, %s18, 1
      %p212 = scmp.lt.s32.totalorder %s19, 0
      %s213 = scalar_select %p212, %s19, 0
      %s214 = smul.addr %s211, 32
      %s215 = sadd.s32 %s213, %s214
      %s216 = smul.addr %s215, 8
      %s217 = scalar_lea.vmem %s0, %s216
      %p218 = scmp.lt.s32.totalorder %s19, 0
      %s219 = scalar_select %p218, %s19, 0
      %s220 = smul.addr %s219, 4
      %s221 = scalar_lea.vmem %s1, %s220
      %p222 = scmp.lt.s32.totalorder %s19, 0
      %s223 = scalar_select %p222, %s19, 0
      %s224 = scalar_lea.vmem %s2, %s223
      %p225 = scmp.lt.s32.totalorder %s18, 1
      %s226 = scalar_select %p225, %s18, 1
      %p227 = scmp.lt.s32.totalorder %s19, 0
      %s228 = scalar_select %p227, %s19, 0
      %s229 = smul.addr %s226, 32
      %s230 = sadd.s32 %s228, %s229
      %s231 = smul.addr %s230, 8
      %s232 = scalar_lea.vmem %s3, %s231
      %vm233 = vcmask 64512
      %234 = vst.msk [vmem:[#allocation2] sm:$0xff] %vm233, 0.0
      %235 = vst.msk [vmem:[#allocation2 + $0x8] sm:$0xff] %vm233, 0.0
      %236 = vst.msk [vmem:[#allocation2 + $0x10] sm:$0xff] %vm233, 0.0
      %s237 = scalar_lea.vmem [#allocation2], 408
      %238 = vst.msk [vmem:[%s237] sm:$0xff] %vm233, 0.0
      %239 = vst.msk [vmem:[%s237 + $0x8] sm:$0xff] %vm233, 0.0
      %240 = vst.msk [vmem:[%s237 + $0x10] sm:$0xff] %vm233, 0.0
      %vm241 = vcmask 57344
      %242 = vst.msk [vmem:[#allocation2] sm:$0x1] %vm241, 0.0
      %243 = vst.msk [vmem:[#allocation2 + $0x18] sm:$0x1] %vm241, 0.0
      %244 = vst.msk [vmem:[#allocation2 + $0x30] sm:$0x1] %vm241, 0.0
      %245 = vst.msk [vmem:[#allocation2 + $0x48] sm:$0x1] %vm241, 0.0
      %246 = vst.msk [vmem:[#allocation2 + $0x60] sm:$0x1] %vm241, 0.0
      %247 = vst.msk [vmem:[#allocation2 + $0x78] sm:$0x1] %vm241, 0.0
      %248 = vst.msk [vmem:[#allocation2 + $0x90] sm:$0x1] %vm241, 0.0
      %249 = vst.msk [vmem:[#allocation2 + $0xa8] sm:$0x1] %vm241, 0.0
      %250 = vst.msk [vmem:[#allocation2 + $0xc0] sm:$0x1] %vm241, 0.0
      %251 = vst.msk [vmem:[#allocation2 + $0xd8] sm:$0x1] %vm241, 0.0
      %252 = vst.msk [vmem:[#allocation2 + $0xf0] sm:$0x1] %vm241, 0.0
      %253 = vst.msk [vmem:[#allocation2 + $0x108] sm:$0x1] %vm241, 0.0
      %254 = vst.msk [vmem:[#allocation2 + $0x120] sm:$0x1] %vm241, 0.0
      %255 = vst.msk [vmem:[#allocation2 + $0x138] sm:$0x1] %vm241, 0.0
      %256 = vst.msk [vmem:[#allocation2 + $0x150] sm:$0x1] %vm241, 0.0
      %257 = vst.msk [vmem:[#allocation2 + $0x168] sm:$0x1] %vm241, 0.0
      %258 = vst.msk [vmem:[#allocation2 + $0x180] sm:$0x1] %vm241, 0.0
      %259 = vst.msk [vmem:[#allocation2 + $0x198] sm:$0x1] %vm241, 0.0
      %260 = vst.msk [vmem:[#allocation2 + $0x11] sm:$0x1] %vm241, 0.0
      %261 = vst.msk [vmem:[#allocation2 + $0x29] sm:$0x1] %vm241, 0.0
      %262 = vst.msk [vmem:[#allocation2 + $0x41] sm:$0x1] %vm241, 0.0
      %263 = vst.msk [vmem:[#allocation2 + $0x59] sm:$0x1] %vm241, 0.0
      %264 = vst.msk [vmem:[#allocation2 + $0x71] sm:$0x1] %vm241, 0.0
      %265 = vst.msk [vmem:[#allocation2 + $0x89] sm:$0x1] %vm241, 0.0
      %266 = vst.msk [vmem:[#allocation2 + $0xa1] sm:$0x1] %vm241, 0.0
      %267 = vst.msk [vmem:[#allocation2 + $0xb9] sm:$0x1] %vm241, 0.0
      %268 = vst.msk [vmem:[#allocation2 + $0xd1] sm:$0x1] %vm241, 0.0
      %269 = vst.msk [vmem:[#allocation2 + $0xe9] sm:$0x1] %vm241, 0.0
      %270 = vst.msk [vmem:[#allocation2 + $0x101] sm:$0x1] %vm241, 0.0
      %271 = vst.msk [vmem:[#allocation2 + $0x119] sm:$0x1] %vm241, 0.0
      %272 = vst.msk [vmem:[#allocation2 + $0x131] sm:$0x1] %vm241, 0.0
      %273 = vst.msk [vmem:[#allocation2 + $0x149] sm:$0x1] %vm241, 0.0
      %274 = vst.msk [vmem:[#allocation2 + $0x161] sm:$0x1] %vm241, 0.0
      %275 = vst.msk [vmem:[#allocation2 + $0x179] sm:$0x1] %vm241, 0.0
      %276 = vst.msk [vmem:[#allocation2 + $0x191] sm:$0x1] %vm241, 0.0
      %277 = vst.msk [vmem:[#allocation2 + $0x1a9] sm:$0x1] %vm241, 0.0
      loop: start=0, step=1, limit=2
      $region33: #{tpu_custom_call.1} parent=31 // loop_pre_header
        _
      $region34: #{tpu_custom_call.1} parent=31 // loop_header
        %s279 = sphi 0, %s283
        %p280 = scmp.ge.s32.totalorder %s279, 2
      $region35: #{tpu_custom_call.1} parent=31 // loop_header_branch
        %282 = sbr.rel (%p280) target = $region39
      $region36: #{tpu_custom_call.1} parent=31 // loop_body
        %s284 = smul.u32 %s279, 8
        %s285 = smul.u32 %s284, 16
        %s286 = scalar_lea.vmem %s217, %s285
        %v287 = vld [vmem:[%s286] sm:$0xff]
        %v288 = vld [vmem:[%s286 + $0x8] sm:$0xff]
        %v289 = vld [vmem:[%s286 + $0x10] sm:$0xff]
        %v290 = vld [vmem:[%s286 + $0x18] sm:$0xff]
        %v291 = vld [vmem:[%s286 + $0x20] sm:$0xff]
        %v292 = vld [vmem:[%s286 + $0x28] sm:$0xff]
        %v293 = vld [vmem:[%s286 + $0x30] sm:$0xff]
        %v294 = vld [vmem:[%s286 + $0x38] sm:$0xff]
        %v295 = vld [vmem:[%s286 + $0x40] sm:$0xff]
        %v296 = vld [vmem:[%s286 + $0x48] sm:$0xff]
        %v297 = vld [vmem:[%s286 + $0x50] sm:$0xff]
        %v298 = vld [vmem:[%s286 + $0x58] sm:$0xff]
        %v299 = vld [vmem:[%s286 + $0x60] sm:$0xff]
        %v300 = vld [vmem:[%s286 + $0x68] sm:$0xff]
        %v301 = vld [vmem:[%s286 + $0x70] sm:$0xff]
        %v302 = vld [vmem:[%s286 + $0x78] sm:$0xff]
        %s303 = sadd.s32 %s284, 1
        %s304 = smul.u32 %s303, 24
        %s305 = scalar_lea.vmem [#allocation2], %s304
        %306 = vst.msk [vmem:[%s305 + $0x1] sm:$0xff] %vm233, %v287
        %307 = vst.msk [vmem:[%s305 + $0x9] sm:$0xff] %vm233, %v288
        %308 = vst.msk [vmem:[%s305 + $0x19] sm:$0xff] %vm233, %v289
        %309 = vst.msk [vmem:[%s305 + $0x21] sm:$0xff] %vm233, %v290
        %310 = vst.msk [vmem:[%s305 + $0x31] sm:$0xff] %vm233, %v291
        %311 = vst.msk [vmem:[%s305 + $0x39] sm:$0xff] %vm233, %v292
        %312 = vst.msk [vmem:[%s305 + $0x49] sm:$0xff] %vm233, %v293
        %313 = vst.msk [vmem:[%s305 + $0x51] sm:$0xff] %vm233, %v294
        %314 = vst.msk [vmem:[%s305 + $0x61] sm:$0xff] %vm233, %v295
        %315 = vst.msk [vmem:[%s305 + $0x69] sm:$0xff] %vm233, %v296
        %316 = vst.msk [vmem:[%s305 + $0x79] sm:$0xff] %vm233, %v297
        %317 = vst.msk [vmem:[%s305 + $0x81] sm:$0xff] %vm233, %v298
        %318 = vst.msk [vmem:[%s305 + $0x91] sm:$0xff] %vm233, %v299
        %319 = vst.msk [vmem:[%s305 + $0x99] sm:$0xff] %vm233, %v300
        %320 = vst.msk [vmem:[%s305 + $0xa9] sm:$0xff] %vm233, %v301
        %321 = vst.msk [vmem:[%s305 + $0xb1] sm:$0xff] %vm233, %v302
      $region37: #{tpu_custom_call.1} parent=31 // loop_footer
        %s283 = sadd.s32 1, %s279
      $region38: #{tpu_custom_call.1} parent=31 // loop_footer_branch
        %278 = sbr.rel target = $region34
      $region39: #{tpu_custom_call.1} parent=31 // loop_exit
        _
      %v322 = vld [vmem:[%s221] sm:$0x7]
      %v323 = vld [vmem:[%s221 + $0x4] sm:$0x7]
      %v324 = vld [vmem:[%s221 + $0x8] sm:$0x7]
      %v325 = vld [vmem:[%s224] sm:$0x1]
      loop: start=0, step=1, limit=2
      $region40: #{tpu_custom_call.1} parent=31 // loop_pre_header
        _
      $region41: #{tpu_custom_call.1} parent=31 // loop_header
        %s327 = sphi 0, %s331
        %p328 = scmp.ge.s32.totalorder %s327, 2
      $region42: #{tpu_custom_call.1} parent=31 // loop_header_branch
        %330 = sbr.rel (%p328) target = $region46
      $region43: #{tpu_custom_call.1} parent=31 // loop_body
        %s332 = smul.u32 %s327, 8
        %v334 = vperm.slane %v325, 0
        %s336 = smul.u32 %s332, 24
        %s337 = scalar_lea.vmem [#allocation2], %s336
        %v338 = vld [vmem:[%s337] sm:$0xff]
        %v339 = vld [vmem:[%s337 + $0x8] sm:$0xff]
        %v340 = vld [vmem:[%s337 + $0x18] sm:$0xff]
        %v341 = vld [vmem:[%s337 + $0x20] sm:$0xff]
        %v342 = vld [vmem:[%s337 + $0x30] sm:$0xff]
        %v343 = vld [vmem:[%s337 + $0x38] sm:$0xff]
        %v344 = vld [vmem:[%s337 + $0x48] sm:$0xff]
        %v345 = vld [vmem:[%s337 + $0x50] sm:$0xff]
        %v346 = vld [vmem:[%s337 + $0x60] sm:$0xff]
        %v347 = vld [vmem:[%s337 + $0x68] sm:$0xff]
        %v348 = vld [vmem:[%s337 + $0x78] sm:$0xff]
        %v349 = vld [vmem:[%s337 + $0x80] sm:$0xff]
        %v350 = vld [vmem:[%s337 + $0x90] sm:$0xff]
        %v351 = vld [vmem:[%s337 + $0x98] sm:$0xff]
        %v352 = vld [vmem:[%s337 + $0xa8] sm:$0xff]
        %v353 = vld [vmem:[%s337 + $0xb0] sm:$0xff]
        %v354 = vperm.slane %v322, 0
        %v355 = vmul.f32 %v338, %v354
        %v356 = vmul.f32 %v339, %v354
        %v357 = vmul.f32 %v340, %v354
        %v358 = vmul.f32 %v341, %v354
        %v359 = vmul.f32 %v342, %v354
        %v360 = vmul.f32 %v343, %v354
        %v361 = vmul.f32 %v344, %v354
        %v362 = vmul.f32 %v345, %v354
        %v363 = vmul.f32 %v346, %v354
        %v364 = vmul.f32 %v347, %v354
        %v365 = vmul.f32 %v348, %v354
        %v366 = vmul.f32 %v349, %v354
        %v367 = vmul.f32 %v350, %v354
        %v368 = vmul.f32 %v351, %v354
        %v369 = vmul.f32 %v352, %v354
        %v370 = vmul.f32 %v353, %v354
        %v371 = vadd.f32 %v334, %v355
        %v372 = vadd.f32 %v334, %v356
        %v373 = vadd.f32 %v334, %v357
        %v374 = vadd.f32 %v334, %v358
        %v375 = vadd.f32 %v334, %v359
        %v376 = vadd.f32 %v334, %v360
        %v377 = vadd.f32 %v334, %v361
        %v378 = vadd.f32 %v334, %v362
        %v379 = vadd.f32 %v334, %v363
        %v380 = vadd.f32 %v334, %v364
        %v381 = vadd.f32 %v334, %v365
        %v382 = vadd.f32 %v334, %v366
        %v383 = vadd.f32 %v334, %v367
        %v384 = vadd.f32 %v334, %v368
        %v385 = vadd.f32 %v334, %v369
        %v386 = vadd.f32 %v334, %v370
        %v387 = vld [vmem:[%s337 + $0x1] sm:$0xff]
        %v388 = vld [vmem:[%s337 + $0x9] sm:$0xff]
        %v389 = vld [vmem:[%s337 + $0x19] sm:$0xff]
        %v390 = vld [vmem:[%s337 + $0x21] sm:$0xff]
        %v391 = vld [vmem:[%s337 + $0x31] sm:$0xff]
        %v392 = vld [vmem:[%s337 + $0x39] sm:$0xff]
        %v393 = vld [vmem:[%s337 + $0x49] sm:$0xff]
        %v394 = vld [vmem:[%s337 + $0x51] sm:$0xff]
        %v395 = vld [vmem:[%s337 + $0x61] sm:$0xff]
        %v396 = vld [vmem:[%s337 + $0x69] sm:$0xff]
        %v397 = vld [vmem:[%s337 + $0x79] sm:$0xff]
        %v398 = vld [vmem:[%s337 + $0x81] sm:$0xff]
        %v399 = vld [vmem:[%s337 + $0x91] sm:$0xff]
        %v400 = vld [vmem:[%s337 + $0x99] sm:$0xff]
        %v401 = vld [vmem:[%s337 + $0xa9] sm:$0xff]
        %v402 = vld [vmem:[%s337 + $0xb1] sm:$0xff]
        %v403 = vperm.slane %v322, 1
        %v404 = vmul.f32 %v387, %v403
        %v405 = vmul.f32 %v388, %v403
        %v406 = vmul.f32 %v389, %v403
        %v407 = vmul.f32 %v390, %v403
        %v408 = vmul.f32 %v391, %v403
        %v409 = vmul.f32 %v392, %v403
        %v410 = vmul.f32 %v393, %v403
        %v411 = vmul.f32 %v394, %v403
        %v412 = vmul.f32 %v395, %v403
        %v413 = vmul.f32 %v396, %v403
        %v414 = vmul.f32 %v397, %v403
        %v415 = vmul.f32 %v398, %v403
        %v416 = vmul.f32 %v399, %v403
        %v417 = vmul.f32 %v400, %v403
        %v418 = vmul.f32 %v401, %v403
        %v419 = vmul.f32 %v402, %v403
        %v420 = vadd.f32 %v371, %v404
        %v421 = vadd.f32 %v372, %v405
        %v422 = vadd.f32 %v373, %v406
        %v423 = vadd.f32 %v374, %v407
        %v424 = vadd.f32 %v375, %v408
        %v425 = vadd.f32 %v376, %v409
        %v426 = vadd.f32 %v377, %v410
        %v427 = vadd.f32 %v378, %v411
        %v428 = vadd.f32 %v379, %v412
        %v429 = vadd.f32 %v380, %v413
        %v430 = vadd.f32 %v381, %v414
        %v431 = vadd.f32 %v382, %v415
        %v432 = vadd.f32 %v383, %v416
        %v433 = vadd.f32 %v384, %v417
        %v434 = vadd.f32 %v385, %v418
        %v435 = vadd.f32 %v386, %v419
        %v436 = vld [vmem:[%s337 + $0x2] sm:$0xff]
        %v437 = vld [vmem:[%s337 + $0xa] sm:$0xff]
        %v438 = vld [vmem:[%s337 + $0x1a] sm:$0xff]
        %v439 = vld [vmem:[%s337 + $0x22] sm:$0xff]
        %v440 = vld [vmem:[%s337 + $0x32] sm:$0xff]
        %v441 = vld [vmem:[%s337 + $0x3a] sm:$0xff]
        %v442 = vld [vmem:[%s337 + $0x4a] sm:$0xff]
        %v443 = vld [vmem:[%s337 + $0x52] sm:$0xff]
        %v444 = vld [vmem:[%s337 + $0x62] sm:$0xff]
        %v445 = vld [vmem:[%s337 + $0x6a] sm:$0xff]
        %v446 = vld [vmem:[%s337 + $0x7a] sm:$0xff]
        %v447 = vld [vmem:[%s337 + $0x82] sm:$0xff]
        %v448 = vld [vmem:[%s337 + $0x92] sm:$0xff]
        %v449 = vld [vmem:[%s337 + $0x9a] sm:$0xff]
        %v450 = vld [vmem:[%s337 + $0xaa] sm:$0xff]
        %v451 = vld [vmem:[%s337 + $0xb2] sm:$0xff]
        %v452 = vperm.slane %v322, 2
        %v453 = vmul.f32 %v436, %v452
        %v454 = vmul.f32 %v437, %v452
        %v455 = vmul.f32 %v438, %v452
        %v456 = vmul.f32 %v439, %v452
        %v457 = vmul.f32 %v440, %v452
        %v458 = vmul.f32 %v441, %v452
        %v459 = vmul.f32 %v442, %v452
        %v460 = vmul.f32 %v443, %v452
        %v461 = vmul.f32 %v444, %v452
        %v462 = vmul.f32 %v445, %v452
        %v463 = vmul.f32 %v446, %v452
        %v464 = vmul.f32 %v447, %v452
        %v465 = vmul.f32 %v448, %v452
        %v466 = vmul.f32 %v449, %v452
        %v467 = vmul.f32 %v450, %v452
        %v468 = vmul.f32 %v451, %v452
        %v469 = vadd.f32 %v420, %v453
        %v470 = vadd.f32 %v421, %v454
        %v471 = vadd.f32 %v422, %v455
        %v472 = vadd.f32 %v423, %v456
        %v473 = vadd.f32 %v424, %v457
        %v474 = vadd.f32 %v425, %v458
        %v475 = vadd.f32 %v426, %v459
        %v476 = vadd.f32 %v427, %v460
        %v477 = vadd.f32 %v428, %v461
        %v478 = vadd.f32 %v429, %v462
        %v479 = vadd.f32 %v430, %v463
        %v480 = vadd.f32 %v431, %v464
        %v481 = vadd.f32 %v432, %v465
        %v482 = vadd.f32 %v433, %v466
        %v483 = vadd.f32 %v434, %v467
        %v484 = vadd.f32 %v435, %v468
        %s485 = sadd.s32 %s332, 1
        %s486 = smul.u32 %s485, 24
        %s487 = scalar_lea.vmem [#allocation2], %s486
        %v488 = vld [vmem:[%s487] sm:$0xff]
        %v489 = vld [vmem:[%s487 + $0x8] sm:$0xff]
        %v490 = vld [vmem:[%s487 + $0x18] sm:$0xff]
        %v491 = vld [vmem:[%s487 + $0x20] sm:$0xff]
        %v492 = vld [vmem:[%s487 + $0x30] sm:$0xff]
        %v493 = vld [vmem:[%s487 + $0x38] sm:$0xff]
        %v494 = vld [vmem:[%s487 + $0x48] sm:$0xff]
        %v495 = vld [vmem:[%s487 + $0x50] sm:$0xff]
        %v496 = vld [vmem:[%s487 + $0x60] sm:$0xff]
        %v497 = vld [vmem:[%s487 + $0x68] sm:$0xff]
        %v498 = vld [vmem:[%s487 + $0x78] sm:$0xff]
        %v499 = vld [vmem:[%s487 + $0x80] sm:$0xff]
        %v500 = vld [vmem:[%s487 + $0x90] sm:$0xff]
        %v501 = vld [vmem:[%s487 + $0x98] sm:$0xff]
        %v502 = vld [vmem:[%s487 + $0xa8] sm:$0xff]
        %v503 = vld [vmem:[%s487 + $0xb0] sm:$0xff]
        %v504 = vperm.slane %v323, 0
        %v505 = vmul.f32 %v488, %v504
        %v506 = vmul.f32 %v489, %v504
        %v507 = vmul.f32 %v490, %v504
        %v508 = vmul.f32 %v491, %v504
        %v509 = vmul.f32 %v492, %v504
        %v510 = vmul.f32 %v493, %v504
        %v511 = vmul.f32 %v494, %v504
        %v512 = vmul.f32 %v495, %v504
        %v513 = vmul.f32 %v496, %v504
        %v514 = vmul.f32 %v497, %v504
        %v515 = vmul.f32 %v498, %v504
        %v516 = vmul.f32 %v499, %v504
        %v517 = vmul.f32 %v500, %v504
        %v518 = vmul.f32 %v501, %v504
        %v519 = vmul.f32 %v502, %v504
        %v520 = vmul.f32 %v503, %v504
        %v521 = vadd.f32 %v469, %v505
        %v522 = vadd.f32 %v470, %v506
        %v523 = vadd.f32 %v471, %v507
        %v524 = vadd.f32 %v472, %v508
        %v525 = vadd.f32 %v473, %v509
        %v526 = vadd.f32 %v474, %v510
        %v527 = vadd.f32 %v475, %v511
        %v528 = vadd.f32 %v476, %v512
        %v529 = vadd.f32 %v477, %v513
        %v530 = vadd.f32 %v478, %v514
        %v531 = vadd.f32 %v479, %v515
        %v532 = vadd.f32 %v480, %v516
        %v533 = vadd.f32 %v481, %v517
        %v534 = vadd.f32 %v482, %v518
        %v535 = vadd.f32 %v483, %v519
        %v536 = vadd.f32 %v484, %v520
        %v537 = vld [vmem:[%s487 + $0x1] sm:$0xff]
        %v538 = vld [vmem:[%s487 + $0x9] sm:$0xff]
        %v539 = vld [vmem:[%s487 + $0x19] sm:$0xff]
        %v540 = vld [vmem:[%s487 + $0x21] sm:$0xff]
        %v541 = vld [vmem:[%s487 + $0x31] sm:$0xff]
        %v542 = vld [vmem:[%s487 + $0x39] sm:$0xff]
        %v543 = vld [vmem:[%s487 + $0x49] sm:$0xff]
        %v544 = vld [vmem:[%s487 + $0x51] sm:$0xff]
        %v545 = vld [vmem:[%s487 + $0x61] sm:$0xff]
        %v546 = vld [vmem:[%s487 + $0x69] sm:$0xff]
        %v547 = vld [vmem:[%s487 + $0x79] sm:$0xff]
        %v548 = vld [vmem:[%s487 + $0x81] sm:$0xff]
        %v549 = vld [vmem:[%s487 + $0x91] sm:$0xff]
        %v550 = vld [vmem:[%s487 + $0x99] sm:$0xff]
        %v551 = vld [vmem:[%s487 + $0xa9] sm:$0xff]
        %v552 = vld [vmem:[%s487 + $0xb1] sm:$0xff]
        %v553 = vperm.slane %v323, 1
        %v554 = vmul.f32 %v537, %v553
        %v555 = vmul.f32 %v538, %v553
        %v556 = vmul.f32 %v539, %v553
        %v557 = vmul.f32 %v540, %v553
        %v558 = vmul.f32 %v541, %v553
        %v559 = vmul.f32 %v542, %v553
        %v560 = vmul.f32 %v543, %v553
        %v561 = vmul.f32 %v544, %v553
        %v562 = vmul.f32 %v545, %v553
        %v563 = vmul.f32 %v546, %v553
        %v564 = vmul.f32 %v547, %v553
        %v565 = vmul.f32 %v548, %v553
        %v566 = vmul.f32 %v549, %v553
        %v567 = vmul.f32 %v550, %v553
        %v568 = vmul.f32 %v551, %v553
        %v569 = vmul.f32 %v552, %v553
        %v570 = vadd.f32 %v521, %v554
        %v571 = vadd.f32 %v522, %v555
        %v572 = vadd.f32 %v523, %v556
        %v573 = vadd.f32 %v524, %v557
        %v574 = vadd.f32 %v525, %v558
        %v575 = vadd.f32 %v526, %v559
        %v576 = vadd.f32 %v527, %v560
        %v577 = vadd.f32 %v528, %v561
        %v578 = vadd.f32 %v529, %v562
        %v579 = vadd.f32 %v530, %v563
        %v580 = vadd.f32 %v531, %v564
        %v581 = vadd.f32 %v532, %v565
        %v582 = vadd.f32 %v533, %v566
        %v583 = vadd.f32 %v534, %v567
        %v584 = vadd.f32 %v535, %v568
        %v585 = vadd.f32 %v536, %v569
        %v586 = vld [vmem:[%s487 + $0x2] sm:$0xff]
        %v587 = vld [vmem:[%s487 + $0xa] sm:$0xff]
        %v588 = vld [vmem:[%s487 + $0x1a] sm:$0xff]
        %v589 = vld [vmem:[%s487 + $0x22] sm:$0xff]
        %v590 = vld [vmem:[%s487 + $0x32] sm:$0xff]
        %v591 = vld [vmem:[%s487 + $0x3a] sm:$0xff]
        %v592 = vld [vmem:[%s487 + $0x4a] sm:$0xff]
        %v593 = vld [vmem:[%s487 + $0x52] sm:$0xff]
        %v594 = vld [vmem:[%s487 + $0x62] sm:$0xff]
        %v595 = vld [vmem:[%s487 + $0x6a] sm:$0xff]
        %v596 = vld [vmem:[%s487 + $0x7a] sm:$0xff]
        %v597 = vld [vmem:[%s487 + $0x82] sm:$0xff]
        %v598 = vld [vmem:[%s487 + $0x92] sm:$0xff]
        %v599 = vld [vmem:[%s487 + $0x9a] sm:$0xff]
        %v600 = vld [vmem:[%s487 + $0xaa] sm:$0xff]
        %v601 = vld [vmem:[%s487 + $0xb2] sm:$0xff]
        %v602 = vperm.slane %v323, 2
        %v603 = vmul.f32 %v586, %v602
        %v604 = vmul.f32 %v587, %v602
        %v605 = vmul.f32 %v588, %v602
        %v606 = vmul.f32 %v589, %v602
        %v607 = vmul.f32 %v590, %v602
        %v608 = vmul.f32 %v591, %v602
        %v609 = vmul.f32 %v592, %v602
        %v610 = vmul.f32 %v593, %v602
        %v611 = vmul.f32 %v594, %v602
        %v612 = vmul.f32 %v595, %v602
        %v613 = vmul.f32 %v596, %v602
        %v614 = vmul.f32 %v597, %v602
        %v615 = vmul.f32 %v598, %v602
        %v616 = vmul.f32 %v599, %v602
        %v617 = vmul.f32 %v600, %v602
        %v618 = vmul.f32 %v601, %v602
        %v619 = vadd.f32 %v570, %v603
        %v620 = vadd.f32 %v571, %v604
        %v621 = vadd.f32 %v572, %v605
        %v622 = vadd.f32 %v573, %v606
        %v623 = vadd.f32 %v574, %v607
        %v624 = vadd.f32 %v575, %v608
        %v625 = vadd.f32 %v576, %v609
        %v626 = vadd.f32 %v577, %v610
        %v627 = vadd.f32 %v578, %v611
        %v628 = vadd.f32 %v579, %v612
        %v629 = vadd.f32 %v580, %v613
        %v630 = vadd.f32 %v581, %v614
        %v631 = vadd.f32 %v582, %v615
        %v632 = vadd.f32 %v583, %v616
        %v633 = vadd.f32 %v584, %v617
        %v634 = vadd.f32 %v585, %v618
        %s635 = sadd.s32 %s332, 2
        %s636 = smul.u32 %s635, 24
        %s637 = scalar_lea.vmem [#allocation2], %s636
        %v638 = vld [vmem:[%s637] sm:$0xff]
        %v639 = vld [vmem:[%s637 + $0x8] sm:$0xff]
        %v640 = vld [vmem:[%s637 + $0x18] sm:$0xff]
        %v641 = vld [vmem:[%s637 + $0x20] sm:$0xff]
        %v642 = vld [vmem:[%s637 + $0x30] sm:$0xff]
        %v643 = vld [vmem:[%s637 + $0x38] sm:$0xff]
        %v644 = vld [vmem:[%s637 + $0x48] sm:$0xff]
        %v645 = vld [vmem:[%s637 + $0x50] sm:$0xff]
        %v646 = vld [vmem:[%s637 + $0x60] sm:$0xff]
        %v647 = vld [vmem:[%s637 + $0x68] sm:$0xff]
        %v648 = vld [vmem:[%s637 + $0x78] sm:$0xff]
        %v649 = vld [vmem:[%s637 + $0x80] sm:$0xff]
        %v650 = vld [vmem:[%s637 + $0x90] sm:$0xff]
        %v651 = vld [vmem:[%s637 + $0x98] sm:$0xff]
        %v652 = vld [vmem:[%s637 + $0xa8] sm:$0xff]
        %v653 = vld [vmem:[%s637 + $0xb0] sm:$0xff]
        %v654 = vperm.slane %v324, 0
        %v655 = vmul.f32 %v638, %v654
        %v656 = vmul.f32 %v639, %v654
        %v657 = vmul.f32 %v640, %v654
        %v658 = vmul.f32 %v641, %v654
        %v659 = vmul.f32 %v642, %v654
        %v660 = vmul.f32 %v643, %v654
        %v661 = vmul.f32 %v644, %v654
        %v662 = vmul.f32 %v645, %v654
        %v663 = vmul.f32 %v646, %v654
        %v664 = vmul.f32 %v647, %v654
        %v665 = vmul.f32 %v648, %v654
        %v666 = vmul.f32 %v649, %v654
        %v667 = vmul.f32 %v650, %v654
        %v668 = vmul.f32 %v651, %v654
        %v669 = vmul.f32 %v652, %v654
        %v670 = vmul.f32 %v653, %v654
        %v671 = vadd.f32 %v619, %v655
        %v672 = vadd.f32 %v620, %v656
        %v673 = vadd.f32 %v621, %v657
        %v674 = vadd.f32 %v622, %v658
        %v675 = vadd.f32 %v623, %v659
        %v676 = vadd.f32 %v624, %v660
        %v677 = vadd.f32 %v625, %v661
        %v678 = vadd.f32 %v626, %v662
        %v679 = vadd.f32 %v627, %v663
        %v680 = vadd.f32 %v628, %v664
        %v681 = vadd.f32 %v629, %v665
        %v682 = vadd.f32 %v630, %v666
        %v683 = vadd.f32 %v631, %v667
        %v684 = vadd.f32 %v632, %v668
        %v685 = vadd.f32 %v633, %v669
        %v686 = vadd.f32 %v634, %v670
        %v687 = vld [vmem:[%s637 + $0x1] sm:$0xff]
        %v688 = vld [vmem:[%s637 + $0x9] sm:$0xff]
        %v689 = vld [vmem:[%s637 + $0x19] sm:$0xff]
        %v690 = vld [vmem:[%s637 + $0x21] sm:$0xff]
        %v691 = vld [vmem:[%s637 + $0x31] sm:$0xff]
        %v692 = vld [vmem:[%s637 + $0x39] sm:$0xff]
        %v693 = vld [vmem:[%s637 + $0x49] sm:$0xff]
        %v694 = vld [vmem:[%s637 + $0x51] sm:$0xff]
        %v695 = vld [vmem:[%s637 + $0x61] sm:$0xff]
        %v696 = vld [vmem:[%s637 + $0x69] sm:$0xff]
        %v697 = vld [vmem:[%s637 + $0x79] sm:$0xff]
        %v698 = vld [vmem:[%s637 + $0x81] sm:$0xff]
        %v699 = vld [vmem:[%s637 + $0x91] sm:$0xff]
        %v700 = vld [vmem:[%s637 + $0x99] sm:$0xff]
        %v701 = vld [vmem:[%s637 + $0xa9] sm:$0xff]
        %v702 = vld [vmem:[%s637 + $0xb1] sm:$0xff]
        %v703 = vperm.slane %v324, 1
        %v704 = vmul.f32 %v687, %v703
        %v705 = vmul.f32 %v688, %v703
        %v706 = vmul.f32 %v689, %v703
        %v707 = vmul.f32 %v690, %v703
        %v708 = vmul.f32 %v691, %v703
        %v709 = vmul.f32 %v692, %v703
        %v710 = vmul.f32 %v693, %v703
        %v711 = vmul.f32 %v694, %v703
        %v712 = vmul.f32 %v695, %v703
        %v713 = vmul.f32 %v696, %v703
        %v714 = vmul.f32 %v697, %v703
        %v715 = vmul.f32 %v698, %v703
        %v716 = vmul.f32 %v699, %v703
        %v717 = vmul.f32 %v700, %v703
        %v718 = vmul.f32 %v701, %v703
        %v719 = vmul.f32 %v702, %v703
        %v720 = vadd.f32 %v671, %v704
        %v721 = vadd.f32 %v672, %v705
        %v722 = vadd.f32 %v673, %v706
        %v723 = vadd.f32 %v674, %v707
        %v724 = vadd.f32 %v675, %v708
        %v725 = vadd.f32 %v676, %v709
        %v726 = vadd.f32 %v677, %v710
        %v727 = vadd.f32 %v678, %v711
        %v728 = vadd.f32 %v679, %v712
        %v729 = vadd.f32 %v680, %v713
        %v730 = vadd.f32 %v681, %v714
        %v731 = vadd.f32 %v682, %v715
        %v732 = vadd.f32 %v683, %v716
        %v733 = vadd.f32 %v684, %v717
        %v734 = vadd.f32 %v685, %v718
        %v735 = vadd.f32 %v686, %v719
        %v736 = vld [vmem:[%s637 + $0x2] sm:$0xff]
        %v737 = vld [vmem:[%s637 + $0xa] sm:$0xff]
        %v738 = vld [vmem:[%s637 + $0x1a] sm:$0xff]
        %v739 = vld [vmem:[%s637 + $0x22] sm:$0xff]
        %v740 = vld [vmem:[%s637 + $0x32] sm:$0xff]
        %v741 = vld [vmem:[%s637 + $0x3a] sm:$0xff]
        %v742 = vld [vmem:[%s637 + $0x4a] sm:$0xff]
        %v743 = vld [vmem:[%s637 + $0x52] sm:$0xff]
        %v744 = vld [vmem:[%s637 + $0x62] sm:$0xff]
        %v745 = vld [vmem:[%s637 + $0x6a] sm:$0xff]
        %v746 = vld [vmem:[%s637 + $0x7a] sm:$0xff]
        %v747 = vld [vmem:[%s637 + $0x82] sm:$0xff]
        %v748 = vld [vmem:[%s637 + $0x92] sm:$0xff]
        %v749 = vld [vmem:[%s637 + $0x9a] sm:$0xff]
        %v750 = vld [vmem:[%s637 + $0xaa] sm:$0xff]
        %v751 = vld [vmem:[%s637 + $0xb2] sm:$0xff]
        %v752 = vperm.slane %v324, 2
        %v753 = vmul.f32 %v736, %v752
        %v754 = vmul.f32 %v737, %v752
        %v755 = vmul.f32 %v738, %v752
        %v756 = vmul.f32 %v739, %v752
        %v757 = vmul.f32 %v740, %v752
        %v758 = vmul.f32 %v741, %v752
        %v759 = vmul.f32 %v742, %v752
        %v760 = vmul.f32 %v743, %v752
        %v761 = vmul.f32 %v744, %v752
        %v762 = vmul.f32 %v745, %v752
        %v763 = vmul.f32 %v746, %v752
        %v764 = vmul.f32 %v747, %v752
        %v765 = vmul.f32 %v748, %v752
        %v766 = vmul.f32 %v749, %v752
        %v767 = vmul.f32 %v750, %v752
        %v768 = vmul.f32 %v751, %v752
        %v769 = vadd.f32 %v720, %v753
        %v770 = vadd.f32 %v721, %v754
        %v771 = vadd.f32 %v722, %v755
        %v772 = vadd.f32 %v723, %v756
        %v773 = vadd.f32 %v724, %v757
        %v774 = vadd.f32 %v725, %v758
        %v775 = vadd.f32 %v726, %v759
        %v776 = vadd.f32 %v727, %v760
        %v777 = vadd.f32 %v728, %v761
        %v778 = vadd.f32 %v729, %v762
        %v779 = vadd.f32 %v730, %v763
        %v780 = vadd.f32 %v731, %v764
        %v781 = vadd.f32 %v732, %v765
        %v782 = vadd.f32 %v733, %v766
        %v783 = vadd.f32 %v734, %v767
        %v784 = vadd.f32 %v735, %v768
        %s785 = smul.u32 %s332, 16
        %s786 = scalar_lea.vmem %s232, %s785
        %787 = vst.msk [vmem:[%s786] sm:$0xff] %vm233, %v769
        %788 = vst.msk [vmem:[%s786 + $0x8] sm:$0xff] %vm233, %v770
        %789 = vst.msk [vmem:[%s786 + $0x10] sm:$0xff] %vm233, %v771
        %790 = vst.msk [vmem:[%s786 + $0x18] sm:$0xff] %vm233, %v772
        %791 = vst.msk [vmem:[%s786 + $0x20] sm:$0xff] %vm233, %v773
        %792 = vst.msk [vmem:[%s786 + $0x28] sm:$0xff] %vm233, %v774
        %793 = vst.msk [vmem:[%s786 + $0x30] sm:$0xff] %vm233, %v775
        %794 = vst.msk [vmem:[%s786 + $0x38] sm:$0xff] %vm233, %v776
        %795 = vst.msk [vmem:[%s786 + $0x40] sm:$0xff] %vm233, %v777
        %796 = vst.msk [vmem:[%s786 + $0x48] sm:$0xff] %vm233, %v778
        %797 = vst.msk [vmem:[%s786 + $0x50] sm:$0xff] %vm233, %v779
        %798 = vst.msk [vmem:[%s786 + $0x58] sm:$0xff] %vm233, %v780
        %799 = vst.msk [vmem:[%s786 + $0x60] sm:$0xff] %vm233, %v781
        %800 = vst.msk [vmem:[%s786 + $0x68] sm:$0xff] %vm233, %v782
        %801 = vst.msk [vmem:[%s786 + $0x70] sm:$0xff] %vm233, %v783
        %802 = vst.msk [vmem:[%s786 + $0x78] sm:$0xff] %vm233, %v784
      $region44: #{tpu_custom_call.1} parent=31 // loop_footer
        %s331 = sadd.s32 1, %s327
      $region45: #{tpu_custom_call.1} parent=31 // loop_footer_branch
        %326 = sbr.rel target = $region41
      $region46: #{tpu_custom_call.1} parent=31 // loop_exit
        _
      %p803 = scmp.lt.s32.totalorder %s18, 1
      %s804 = scalar_select %p803, %s18, 1
      %p805 = scmp.lt.s32.totalorder %s19, 0
      %s806 = scalar_select %p805, %s19, 0
      %s807 = smul.addr %s804, 32
      %s808 = sadd.s32 %s806, %s807
      %s809 = smul.addr %s808, 8
      %s810 = scalar_lea.vmem %s3, %s809
      // Predicated region
      $region47: #{tpu_custom_call.1} parent=31 // pred_check
        %p811 = pneg %p126
      $region48: #{tpu_custom_call.1} parent=31 // pred_check_branch
        %813 = sbr.rel (%p811) target = $region50
      $region49: #{tpu_custom_call.1} parent=31 // pred_region
        _
      $region50: #{tpu_custom_call.1} parent=31 // pred_fallthru
        _
    $region32: #{tpu_custom_call.1} parent=5 // pred_fallthru
      _
    %p814 = scmp.le.s32.totalorder 2, %s9
    // Predicated region
    $region51: #{tpu_custom_call.1} parent=5 // pred_check
      %p815 = pneg %p814
    $region52: #{tpu_custom_call.1} parent=5 // pred_check_branch
      %817 = sbr.rel (%p815) target = $region54
    $region53: #{tpu_custom_call.1} parent=5 // pred_region
      %s818 = ssub.s32 %s9, 2
      // Predicated region
      $region55: #{tpu_custom_call.1} parent=53 // pred_check
        %p819 = pneg %p132
      $region56: #{tpu_custom_call.1} parent=53 // pred_check_branch
        %821 = sbr.rel (%p819) target = $region58
      $region57: #{tpu_custom_call.1} parent=53 // pred_region
        %p822 = scmp.lt.s32.totalorder %s20, 1
        %s823 = scalar_select %p822, %s20, 1
        %p824 = scmp.lt.s32.totalorder %s21, 0
        %s825 = scalar_select %p824, %s21, 0
        %s826 = smul.addr %s823, 32
        %s827 = sadd.s32 %s825, %s826
        %s828 = smul.addr %s827, 8
        %s829 = scalar_lea.vmem %s3, %s828
      $region58: #{tpu_custom_call.1} parent=53 // pred_fallthru
        _
    $region54: #{tpu_custom_call.1} parent=5 // pred_fallthru
      _
  $region6: #{tpu_custom_call.1} parent=0 // loop_footer
    %s13 = sadd.s32 1, %s9
  $region7: #{tpu_custom_call.1} parent=0 // loop_footer_branch
    %8 = sbr.rel target = $region3
  $region8: #{tpu_custom_call.1} parent=0 // loop_exit
    _

</llo_original>
